<compile_context>
chip_gen: v6e
topology: v6e:2x2x1
jax: 0.10.0
libtpu: 0.0.40
codegen_flags: <defaults>
</compile_context>

<pallas_src>
import jax
import jax.numpy as jnp
from jax.experimental import pallas as pl
from jax.experimental.pallas import tpu as pltpu


# ----------------------------------------------------------------------------
# Kernels
# ----------------------------------------------------------------------------
def _linear_kernel_out_acc(x_ref, w_ref, b_ref, o_ref):
    """f32 output: accumulate straight into the resident output block.

    x_ref: (tm, tk)   activations (compute dtype)
    w_ref: (tk, tn)   weight already in [in, out] layout (compute dtype)
    b_ref: (1, tn)    f32 bias slab
    o_ref: (tm, tn)   f32 output tile, resident across the K grid axis
    """
    k = pl.program_id(2)

    @pl.when(k == 0)
    def _init():
        o_ref[...] = jnp.broadcast_to(b_ref[...], o_ref.shape).astype(o_ref.dtype)

    o_ref[...] += jnp.dot(x_ref[...], w_ref[...],
                          preferred_element_type=jnp.float32)


def _linear_kernel_scratch(x_ref, w_ref, b_ref, o_ref, acc_ref):
    """Narrow output dtype: accumulate in an f32 scratch, cast on last K step."""
    k = pl.program_id(2)

    @pl.when(k == 0)
    def _init():
        acc_ref[...] = jnp.broadcast_to(b_ref[...], acc_ref.shape).astype(jnp.float32)

    acc_ref[...] += jnp.dot(x_ref[...], w_ref[...],
                            preferred_element_type=jnp.float32)

    @pl.when(k == pl.num_programs(2) - 1)
    def _finalize():
        o_ref[...] = acc_ref[...].astype(o_ref.dtype)


# ----------------------------------------------------------------------------
# Tiling helpers
# ----------------------------------------------------------------------------
def _round_up(v, m):
    return ((v + m - 1) // m) * m


def _pick_tile_m(m, max_tm=512):
    # Full dim is always legal; otherwise a multiple of 8.
    return m if m <= max_tm else max_tm


def _pick_tile_n(n, max_tn=512):
    # Full dim is always legal; otherwise a multiple of 128 (lane-dense stores).
    return n if n <= max_tn else max_tn


def _pick_tile_k(K, tile_k=None, max_tk=1024):
    """Return (tk, K_pad) with K_pad % tk == 0, so the reduction is never ragged."""
    if tile_k is not None:
        if tile_k >= K:
            return K, K
        assert tile_k % 128 == 0, "tile_k smaller than K must be a multiple of 128"
        return tile_k, _round_up(K, tile_k)
    if K <= max_tk:
        return K, K
    k128 = _round_up(K, 128)
    for cand in (max_tk, 512, 256, 128):
        if k128 % cand == 0:
            return cand, k128
    return 128, k128  # unreachable: k128 is always a multiple of 128


# ----------------------------------------------------------------------------
# Wrapper
# ----------------------------------------------------------------------------
def projection_forward(x, weight, bias, *,
                       compute_dtype=jnp.bfloat16,
                       transposed_weight=False,
                       force_pallas=False,
                       tile_m=None, tile_n=None, tile_k=None):
    """Pallas equivalent of torch.nn.Linear(in_features, out_features).forward.

    x:      [..., in_features]
    weight: [out_features, in_features]  (PyTorch layout) or, if
            transposed_weight=True, [in_features, out_features]
    bias:   [out_features]
    returns [..., out_features]  in x.dtype
    """
    *lead, K = x.shape
    if transposed_weight:
        K2, N = weight.shape
    else:
        N, K2 = weight.shape
    assert K == K2, (K, K2)

    out_dtype = x.dtype
    x2 = x.reshape(-1, K).astype(compute_dtype)
    M = x2.shape[0]
    # Transpose fuses with the dtype cast; with transposed_weight=True (store
    # weights as [in, out] at model-load time) no per-call pass is needed at all.
    w_t = (weight if transposed_weight else weight.T).astype(compute_dtype)
    b2 = bias.reshape(1, N).astype(jnp.float32)

    # Tiny-shape bypass: a 1x1x1 grid with <128-wide output is dominated by
    # pallas_call fixed overhead and masked vst.msk stores; XLA's fused dot wins.
    if not force_pallas and (N < 128 or M * N * K < (1 << 21)):
        out2 = (jnp.dot(x2, w_t, preferred_element_type=jnp.float32)
                + b2).astype(out_dtype)
        return out2.reshape(*lead, N)

    # ---- tile selection ----------------------------------------------------
    tm = tile_m if tile_m is not None else _pick_tile_m(M)
    tn = tile_n if tile_n is not None else _pick_tile_n(N)
    tk, K_pad = _pick_tile_k(K, tile_k)

    # Guarantee >=2 parallel output tiles (v7x has 2 TensorCores sharded over
    # the "parallel" grid axes) when the auto-picker would yield a single one.
    if tile_m is None and tile_n is None and pl.cdiv(M, tm) * pl.cdiv(N, tn) == 1:
        if N >= 256:
            tn = _round_up(pl.cdiv(N, 2), 128)
        elif M >= 16:
            tm = _round_up(pl.cdiv(M, 2), 8)

    # Zero-pad K so the reduction axis is never ragged (garbage never
    # accumulated); M/N raggedness is harmless (OOB rows/cols are discarded).
    if K_pad > K:
        x2 = jnp.pad(x2, ((0, 0), (0, K_pad - K)))
        w_t = jnp.pad(w_t, ((0, K_pad - K), (0, 0)))

    grid = (pl.cdiv(M, tm), pl.cdiv(N, tn), K_pad // tk)
    grid_m, grid_n = grid[0], grid[1]

    use_out_acc = (out_dtype == jnp.float32)
    kernel = _linear_kernel_out_acc if use_out_acc else _linear_kernel_scratch
    scratch = [] if use_out_acc else [pltpu.VMEM((tm, tn), jnp.float32)]

    in_b = jnp.dtype(compute_dtype).itemsize
    out_b = jnp.dtype(out_dtype).itemsize
    # Double-buffered inputs + outputs (+ f32 scratch when present).
    footprint = (2 * (tm * tk + tk * tn) * in_b
                 + 2 * tn * 4
                 + 2 * tm * tn * out_b
                 + (0 if use_out_acc else tm * tn * 4))
    vmem_limit = int(min(64 << 20, max(32 << 20, 2 * footprint)))

    cost = pl.CostEstimate(
        flops=2 * M * N * K_pad,
        transcendentals=0,
        # x is re-streamed once per N tile, the weight once per M tile.
        bytes_accessed=(grid_n * M * K_pad + grid_m * K_pad * N) * in_b
                       + N * 4 + M * N * out_b,
    )

    out2 = pl.pallas_call(
        kernel,
        out_shape=jax.ShapeDtypeStruct((M, N), out_dtype),
        grid_spec=pltpu.PrefetchScalarGridSpec(
            num_scalar_prefetch=0,
            grid=grid,
            in_specs=[
                pl.BlockSpec((tm, tk), lambda i, j, k: (i, k)),   # x tile
                pl.BlockSpec((tk, tn), lambda i, j, k: (k, j)),   # weight [in,out] tile
                pl.BlockSpec((1, tn), lambda i, j, k: (0, j)),    # bias slab
            ],
            out_specs=pl.BlockSpec((tm, tn), lambda i, j, k: (i, j)),
            scratch_shapes=scratch,
        ),
        compiler_params=pltpu.CompilerParams(
            dimension_semantics=("parallel", "parallel", "arbitrary"),
            vmem_limit_bytes=vmem_limit),
        cost_estimate=cost,
    )(x2, w_t, b2)

    return out2.reshape(*lead, N)


def init_linear_params(key, in_features, out_features, dtype=jnp.float32):
    # Deterministic init mirroring torch.nn.Linear's default
    # (uniform(-1/sqrt(in), 1/sqrt(in)) for both weight and bias).
    kw, kb = jax.random.split(key)
    bound = 1.0 / (in_features ** 0.5)
    weight = jax.random.uniform(
        kw, (out_features, in_features), dtype=dtype, minval=-bound, maxval=bound)
    bias = jax.random.uniform(
        kb, (out_features,), dtype=dtype, minval=-bound, maxval=bound)
    return weight, bias


if __name__ == "__main__":
    key = jax.random.PRNGKey(0)
    k_x, k_p, k_x2, k_p2 = jax.random.split(key, 4)

    # --- tiny shape matching the module's small-projection use case ---------
    batch, in_features, out_features = 8, 32, 16
    x = jax.random.normal(k_x, (batch, in_features), dtype=jnp.float32)
    weight, bias = init_linear_params(k_p, in_features, out_features)
    y_ref = x @ weight.T + bias

    # Default path: tiny shape routes to the XLA-fallback (bf16 compute).
    y_small = jax.block_until_ready(projection_forward(x, weight, bias))
    assert y_small.shape == (batch, out_features)
    assert jnp.allclose(y_small, y_ref, atol=3e-2, rtol=3e-2)

    # Force the Pallas kernel on the tiny shape in exact-f32 mode.
    y_small_pl = jax.block_until_ready(
        projection_forward(x, weight, bias,
                           compute_dtype=jnp.float32, force_pallas=True))
    assert jnp.allclose(y_small_pl, y_ref, atol=1e-4, rtol=1e-4)

    # --- larger shape: M/N/K tiling, K zero-padding, bf16 MXU path ----------
    # M: 2 tiles (ragged); N: 1 full tile; K=1500 -> padded to 1536, tk=512.
    M2, K2, N2 = 640, 1500, 384
    xb = jax.random.normal(k_x2, (M2, K2), dtype=jnp.float32)
    wb, bb = init_linear_params(k_p2, K2, N2)
    yb_ref = jnp.dot(xb, wb.T, precision=jax.lax.Precision.HIGHEST) + bb

    yb_bf16 = jax.block_until_ready(projection_forward(xb, wb, bb))
    assert yb_bf16.shape == (M2, N2)
    assert jnp.allclose(yb_bf16, yb_ref, atol=3e-2, rtol=3e-2)

    yb_f32 = jax.block_until_ready(
        projection_forward(xb, wb, bb, compute_dtype=jnp.float32))
    assert jnp.allclose(yb_f32, yb_ref, atol=2e-3, rtol=2e-3)

    print("KERNEL_OK")
</pallas_src>

<mosaic_0001>
module attributes {stable_mosaic.version = 11 : i64} {
  func.func @_linear_kernel_out_acc(%arg0: i32, %arg1: i32, %arg2: i32, %arg3: memref<8x32xf32, #tpu.memory_space<vmem>>, %arg4: memref<32x16xf32, #tpu.memory_space<vmem>>, %arg5: memref<1x16xf32, #tpu.memory_space<vmem>>, %arg6: memref<8x16xf32, #tpu.memory_space<vmem>>) attributes {dimension_semantics = [#tpu.dimension_semantics<parallel>, #tpu.dimension_semantics<parallel>, #tpu.dimension_semantics<arbitrary>], iteration_bounds = array<i64: 1, 1, 1>, scalar_prefetch = 0 : i64, scratch_operands = 0 : i64, tpu.core_type = #tpu.core_type<tc>, window_params = [{transform_indices = @transform_0, window_bounds = array<i64: 8, 32>}, {transform_indices = @transform_1, window_bounds = array<i64: 32, 16>}, {transform_indices = @transform_2, window_bounds = array<i64: 1, 16>}, {transform_indices = @transform_3, window_bounds = array<i64: 8, 16>}]} {
    %c0_i32 = arith.constant 0 : i32
    %0 = arith.cmpi eq, %arg2, %c0_i32 : i32
    %1 = arith.extui %0 : i1 to i32
    %c0_i32_0 = arith.constant 0 : i32
    %2 = arith.cmpi ne, %1, %c0_i32_0 : i32
    scf.if %2 {
      %c0_8 = arith.constant 0 : index
      %c0_9 = arith.constant 0 : index
      %9 = vector.load %arg5[%c0_8, %c0_9] : memref<1x16xf32, #tpu.memory_space<vmem>>, vector<1x16xf32>
      %10 = vector.shape_cast %9 : vector<1x16xf32> to vector<1x16xf32>
      %11 = vector.broadcast %10 : vector<1x16xf32> to vector<8x16xf32>
      %c0_10 = arith.constant 0 : index
      %c0_11 = arith.constant 0 : index
      %12 = vector.load %arg6[%c0_10, %c0_11] : memref<8x16xf32, #tpu.memory_space<vmem>>, vector<8x16xf32>
      tpu.vector_store %arg6[%c0_10, %c0_11], %11 {strides = array<i32>} : memref<8x16xf32, #tpu.memory_space<vmem>>, vector<8x16xf32>,
    } else {
    }
    %c0 = arith.constant 0 : index
    %c0_1 = arith.constant 0 : index
    %3 = vector.load %arg6[%c0, %c0_1] : memref<8x16xf32, #tpu.memory_space<vmem>>, vector<8x16xf32>
    %c0_2 = arith.constant 0 : index
    %c0_3 = arith.constant 0 : index
    %4 = vector.load %arg3[%c0_2, %c0_3] : memref<8x32xf32, #tpu.memory_space<vmem>>, vector<8x32xf32>
    %c0_4 = arith.constant 0 : index
    %c0_5 = arith.constant 0 : index
    %5 = vector.load %arg4[%c0_4, %c0_5] : memref<32x16xf32, #tpu.memory_space<vmem>>, vector<32x16xf32>
    %cst = arith.constant dense<0.000000e+00> : vector<8x16xf32>
    %6 = tpu.matmul %4, %5, %cst {dimension_numbers = #tpu.dot_dimension_numbers<[1], [0], [0], [1], [0, 0, 1, 1], [], []>} : vector<8x32xf32>, vector<32x16xf32>, vector<8x16xf32> -> vector<8x16xf32>
    %7 = arith.addf %3, %6 : vector<8x16xf32>
    %c0_6 = arith.constant 0 : index
    %c0_7 = arith.constant 0 : index
    %8 = vector.load %arg6[%c0_6, %c0_7] : memref<8x16xf32, #tpu.memory_space<vmem>>, vector<8x16xf32>
    tpu.vector_store %arg6[%c0_6, %c0_7], %7 {strides = array<i32>} : memref<8x16xf32, #tpu.memory_space<vmem>>, vector<8x16xf32>,
    return
  }
  func.func @transform_0(%arg0: i32, %arg1: i32, %arg2: i32) -> (i32, i32) {
    %c0_i32 = arith.constant 0 : i32
    return %arg0, %arg2 : i32, i32
  }
  func.func @transform_1(%arg0: i32, %arg1: i32, %arg2: i32) -> (i32, i32) {
    %c0_i32 = arith.constant 0 : i32
    return %arg2, %arg1 : i32, i32
  }
  func.func @transform_2(%arg0: i32, %arg1: i32, %arg2: i32) -> (i32, i32) {
    %c0_i32 = arith.constant 0 : i32
    %c0_i32_0 = arith.constant 0 : i32
    return %c0_i32, %arg1 : i32, i32
  }
  func.func @transform_3(%arg0: i32, %arg1: i32, %arg2: i32) -> (i32, i32) {
    %c0_i32 = arith.constant 0 : i32
    return %arg0, %arg1 : i32, i32
  }
}

</mosaic_0001>

<llo_original>
// kernel: tpu_custom_call.1
$region0: #{tpu_custom_call.1}
  #allocation0 [shape = 'u32[]', space=smem, size = 0x4, offset = 0x4, fixed_abs, tag = 'smem constant byte address 0x4 - core index']
  #allocation1 [shape = 'u32[144,128]{1,0:T(1,128)}', space=vmem, size = 0x12000, scoped, tag = 'internal scratch']
  %s0 = inlined_call_operand.vmem [shape: f32[8,32], index: 0, kind: input, shape index: {}]
  %s1 = inlined_call_operand.vmem [shape: f32[32,16], index: 1, kind: input, shape index: {}]
  %s2 = inlined_call_operand.vmem [shape: f32[1,16], index: 2, kind: input, shape index: {}]
  %s3 = inlined_call_operand.hbm [shape: f32[8,16], index: 3, kind: output, shape index: {}]
  %s4 = sld [smem:[#allocation0]]
  $region26: #{tpu_custom_call.1} parent=0
    _
  %s6 = ssub.s32 1, %s4
  %s7 = scalar_select 0, %s6, %s4
  $region1: #{tpu_custom_call.1} parent=0
    #allocation2 [shape = 'u8[4096]{0}', space=vmem, size = 0x1000, scoped, tag = 'output window, operand 0, single buffered']
    #allocation3 [shape = 's32[1]{0}', space=sflag, size = 0x4, scoped, tag = 'scoped memory for tpu_custom_call.1']
    %8 = vsyncpa [#allocation3], 0
    // Predicated region
    $region2: #{tpu_custom_call.1} parent=1 // pred_check
      _
    $region3: #{tpu_custom_call.1} parent=1 // pred_check_branch
      %10 = sbr.rel (0) target = $region5
    $region4: #{tpu_custom_call.1} parent=1 // pred_region
      _
    $region5: #{tpu_custom_call.1} parent=1 // pred_fallthru
      _
    // Predicated region
    $region6: #{tpu_custom_call.1} parent=1 // pred_check
      _
    $region7: #{tpu_custom_call.1} parent=1 // pred_check_branch
      %12 = sbr.rel (0) target = $region9
    $region8: #{tpu_custom_call.1} parent=1 // pred_region
      _
    $region9: #{tpu_custom_call.1} parent=1 // pred_fallthru
      _
    // Predicated region
    $region10: #{tpu_custom_call.1} parent=1 // pred_check
      _
    $region11: #{tpu_custom_call.1} parent=1 // pred_check_branch
      %14 = sbr.rel (0) target = $region13
    $region12: #{tpu_custom_call.1} parent=1 // pred_region
      _
    $region13: #{tpu_custom_call.1} parent=1 // pred_fallthru
      _
    %p15 = scmp.eq.s32.totalorder 0, 0
    // Predicated region
    $region14: #{tpu_custom_call.1} parent=1 // pred_check
      %p16 = pneg %p15
    $region15: #{tpu_custom_call.1} parent=1 // pred_check_branch
      %18 = sbr.rel (%p16) target = $region17
    $region16: #{tpu_custom_call.1} parent=1 // pred_region
      %v19 = vld [vmem:[%s2] sm:$0x1]
      %v21 = vlaneseq
      %v22 = vshrl.u32 %v21, 7
      %v23 = vsub.s32 0, %v22
      %v24 = vrot.slane %v19, %v23
      %vm26 = vcmask 130048
      %27 = vst.msk [vmem:[#allocation2] sm:$0xff] %vm26, %v24
    $region17: #{tpu_custom_call.1} parent=1 // pred_fallthru
      _
    %v28 = vld [vmem:[#allocation2] sm:$0xff]
    %v29 = vld [vmem:[%s0] sm:$0xff]
    %v30 = vld [vmem:[%s1] sm:$0xff]
    %v31 = vld [vmem:[%s1 + $0x8] sm:$0xff]
    %v32 = vld [vmem:[%s1 + $0x10] sm:$0xff]
    %v33 = vld [vmem:[%s1 + $0x18] sm:$0xff]
    %vm34 = vcmask 261120
    %v36 = vsel %vm34, %v29, 0
    %38 = vmatprep.subr.mxu0 0.0
    %39 = vmatpush1.msra.mxu0 0.0
    %40 = vmatprep.subr.mxu0 0.0
    %41 = vmatpush1.msra.mxu0 0.0
    %42 = vmatprep.subr.mxu0 0.0
    %43 = vmatpush1.msra.mxu0 0.0
    %44 = vmatprep.subr.mxu0 0.0
    %45 = vmatpush1.msra.mxu0 0.0
    %46 = vmatprep.subr.mxu0 0.0
    %47 = vmatpush1.msra.mxu0 0.0
    %48 = vmatprep.subr.mxu0 0.0
    %49 = vmatpush1.msra.mxu0 0.0
    %50 = vmatprep.subr.mxu0 0.0
    %51 = vmatpush1.msra.mxu0 0.0
    %52 = vmatprep.subr.mxu0 0.0
    %53 = vmatpush1.msra.mxu0 0.0
    %54 = vmatprep.subr.mxu0 0.0
    %55 = vmatpush1.msra.mxu0 0.0
    %56 = vmatprep.subr.mxu0 0.0
    %57 = vmatpush1.msra.mxu0 0.0
    %58 = vmatprep.subr.mxu0 0.0
    %59 = vmatpush1.msra.mxu0 0.0
    %60 = vmatprep.subr.mxu0 0.0
    %61 = vmatpush1.msra.mxu0 0.0
    %62 = vmatprep.subr.mxu0 0.0
    %63 = vmatpush1.msra.mxu0 %v33
    %64 = vmatprep.subr.mxu0 0.0
    %65 = vmatpush1.msra.mxu0 %v32
    %66 = vmatprep.subr.mxu0 0.0
    %67 = vmatpush1.msra.mxu0 %v31
    %68 = vmatprep.subr.mxu0 0.0
    %69 = vmatpush1.msra.mxu0 %v30
    %70 = vmatprep.subr.mxu0 0.0
    %71 = vmatpush2.msra.mxu0 0.0
    %72 = vmatprep.subr.mxu0 0.0
    %73 = vmatpush2.msra.mxu0 0.0
    %74 = vmatprep.subr.mxu0 0.0
    %75 = vmatpush2.msra.mxu0 0.0
    %76 = vmatprep.subr.mxu0 0.0
    %77 = vmatpush2.msra.mxu0 0.0
    %78 = vmatprep.subr.mxu0 0.0
    %79 = vmatpush2.msra.mxu0 0.0
    %80 = vmatprep.subr.mxu0 0.0
    %81 = vmatpush2.msra.mxu0 0.0
    %82 = vmatprep.subr.mxu0 0.0
    %83 = vmatpush2.msra.mxu0 0.0
    %84 = vmatprep.subr.mxu0 0.0
    %85 = vmatpush2.msra.mxu0 0.0
    %86 = vmatprep.subr.mxu0 0.0
    %87 = vmatpush2.msra.mxu0 0.0
    %88 = vmatprep.subr.mxu0 0.0
    %89 = vmatpush2.msra.mxu0 0.0
    %90 = vmatprep.subr.mxu0 0.0
    %91 = vmatpush2.msra.mxu0 0.0
    %92 = vmatprep.subr.mxu0 0.0
    %93 = vmatpush2.msra.mxu0 0.0
    %94 = vmatprep.subr.mxu0 0.0
    %95 = vmatpush2.msra.mxu0 0.0
    %96 = vmatprep.subr.mxu0 0.0
    %97 = vmatpush2.msra.mxu0 0.0
    %98 = vmatprep.subr.mxu0 0.0
    %99 = vmatpush2.msra.mxu0 0.0
    %100 = vmatprep.subr.mxu0 0.0
    %101 = vmatpush2.msra.mxu0 0.0
    %102 = vmatprep.mubr.f32.mxu0 0.0
    %103 = vmatmul.mubr.f32.gmra.mxu0 %v36
    %v104 = vpop.f32.mrf.mxu0
    %v105 = vadd.f32 0.0, %v104
    %v106 = vpop.f32.mrf.mxu0
    %107 = vdwg.mxu0
    %v108 = vadd.f32 %v28, %v105
    %vm109 = vcmask 130048
    %110 = vst.msk [vmem:[#allocation2] sm:$0xff] %vm109, %v108
    // Predicated region
    $region18: #{tpu_custom_call.1} parent=1 // pred_check
      _
    $region19: #{tpu_custom_call.1} parent=1 // pred_check_branch
      %112 = sbr.rel (0) target = $region21
    $region20: #{tpu_custom_call.1} parent=1 // pred_region
      %s114 = ssub.s32 128, 128
      %115 = vsyncadd [#allocation3], %s114
      %s117 = sshll.u32 [#allocation2], 4
      %s118 = int_to_ptr.vmem [resolvable:$true] %s117
      %120 = dma.vmem_to_hbm [thread:$0]  %s118, 128, %s3, [#allocation3]
    $region21: #{tpu_custom_call.1} parent=1 // pred_fallthru
      _
    // Predicated region
    $region22: #{tpu_custom_call.1} parent=1 // pred_check
      _
    $region23: #{tpu_custom_call.1} parent=1 // pred_check_branch
      %122 = sbr.rel (0) target = $region25
    $region24: #{tpu_custom_call.1} parent=1 // pred_region
      %123 = dma.done [#allocation3], 128
    $region25: #{tpu_custom_call.1} parent=1 // pred_fallthru
      _
    %124 = vsyncpa [#allocation3], 1

</llo_original>
